<compile_context>
chip_gen: v7x
topology: tpu7x:2x2x1
jax: 0.10.0
libtpu: 0.0.40
codegen_flags: <defaults>
</compile_context>

<pallas_src>
import functools

import jax
import jax.numpy as jnp
from jax.experimental import pallas as pl
from jax.experimental.pallas import tpu as pltpu


def _round_up(x, m):
    return (x + m - 1) // m * m


def mlp_bn_lrelu_kernel(x_ref, w_ref, b_ref, o_ref, *, neg_slope):
    """One (tm, tn) output tile per grid step.

    x_ref: (tm, Kp)   activations tile (full padded contraction dim)
    w_ref: (Kp, tn)   BN-scale-folded weights tile
    b_ref: (1,  tn)   folded (linear bias + BN) bias
    o_ref: (tm, tn)   output tile (lane-dense: tn is a multiple of 128)
    """
    acc = jnp.dot(x_ref[...], w_ref[...], preferred_element_type=jnp.float32)
    y = acc + b_ref[...]                       # folded linear-bias + BatchNorm shift
    y = jnp.where(y >= 0.0, y, y * neg_slope)  # LeakyReLU
    o_ref[...] = y.astype(o_ref.dtype)


@functools.partial(jax.jit, static_argnames=("neg_slope", "eps"))
def mlp_block_forward(x, w_oi, lin_bias, gamma, beta,
                      running_mean, running_var, neg_slope=0.1, eps=1e-5):
    """MLPBlock forward.

    x:        (M, K)  input batch
    w_oi:     (N, K)  nn.Linear weight (out_features, in_features)
    lin_bias: (N,)    nn.Linear bias
    gamma, beta, running_mean, running_var: (N,) BatchNorm1d params / running stats
    Returns (M, N).
    """
    M, K = x.shape
    N = w_oi.shape[0]

    # ---- Wrapper-side parameter folding (plain JAX, one-time cost) -------------
    scale = gamma / jnp.sqrt(running_var + eps)                      # (N,)
    w_folded = jnp.transpose(w_oi).astype(jnp.float32) * scale[None, :]   # (K, N)
    bias_folded = ((lin_bias - running_mean) * scale + beta).astype(jnp.float32)

    # ---- Pad to TPU-friendly shapes (lane-dense N, aligned M/K) ----------------
    Kp = _round_up(max(K, 1), 128)
    Np = _round_up(max(N, 1), 128)
    if M <= 128:
        Mp = _round_up(max(M, 1), 8)
        tm = Mp
    else:
        Mp = _round_up(M, 128)
        tm = 128
    tn = 128 if Np % 256 else 256   # 128-granule (v5e native), 256 where it divides

    x_p = jnp.zeros((Mp, Kp), jnp.float32).at[:M, :K].set(x.astype(jnp.float32))
    w_p = jnp.zeros((Kp, Np), jnp.float32).at[:K, :N].set(w_folded)
    b_p = jnp.zeros((1, Np), jnp.float32).at[0, :N].set(bias_folded)

    grid = (Mp // tm, Np // tn)

    out_p = pl.pallas_call(
        functools.partial(mlp_bn_lrelu_kernel, neg_slope=neg_slope),
        out_shape=jax.ShapeDtypeStruct((Mp, Np), x.dtype),
        grid_spec=pltpu.PrefetchScalarGridSpec(
            num_scalar_prefetch=0,
            grid=grid,
            in_specs=[
                pl.BlockSpec((tm, Kp), lambda i, j: (i, 0)),
                pl.BlockSpec((Kp, tn), lambda i, j: (0, j)),
                pl.BlockSpec((1, tn), lambda i, j: (0, j)),
            ],
            out_specs=pl.BlockSpec((tm, tn), lambda i, j: (i, j)),
        ),
        compiler_params=pltpu.CompilerParams(
            dimension_semantics=("parallel", "parallel"),
        ),
    )(x_p, w_p, b_p)

    return out_p[:M, :N]


def reference_forward(x, w_oi, lin_bias, gamma, beta,
                      running_mean, running_var, neg_slope=0.1, eps=1e-5):
    """Pure-JAX reference (Linear + eval-mode BN1d + LeakyReLU)."""
    y = x.astype(jnp.float32) @ jnp.transpose(w_oi.astype(jnp.float32)) + lin_bias
    y = (y - running_mean) / jnp.sqrt(running_var + eps) * gamma + beta
    return jnp.where(y >= 0.0, y, y * neg_slope)


if __name__ == "__main__":
    # Small shapes consistent with the module: batch=2, in_features=16, out_features=32.
    M, K, N = 2, 16, 32
    neg_slope = 0.1

    key = jax.random.PRNGKey(0)
    k_x, k_w, k_b, k_g, k_be, k_m, k_v = jax.random.split(key, 7)

    x = jax.random.normal(k_x, (M, K), dtype=jnp.float32)
    w = jax.random.normal(k_w, (N, K), dtype=jnp.float32) * 0.1
    lin_bias = jax.random.normal(k_b, (N,), dtype=jnp.float32) * 0.1
    gamma = 1.0 + 0.1 * jax.random.normal(k_g, (N,), dtype=jnp.float32)
    beta = 0.1 * jax.random.normal(k_be, (N,), dtype=jnp.float32)
    running_mean = 0.1 * jax.random.normal(k_m, (N,), dtype=jnp.float32)
    running_var = jnp.abs(1.0 + 0.1 * jax.random.normal(k_v, (N,), dtype=jnp.float32))

    out = mlp_block_forward(x, w, lin_bias, gamma, beta, running_mean, running_var,
                            neg_slope=neg_slope)
    out = jax.block_until_ready(out)

    ref = reference_forward(x, w, lin_bias, gamma, beta, running_mean, running_var,
                            neg_slope=neg_slope)
    assert out.shape == (M, N)
    assert jnp.allclose(out, ref, atol=1e-4, rtol=1e-4), "mismatch vs reference"

    print("KERNEL_OK")
</pallas_src>

<mosaic_0001>
module attributes {stable_mosaic.version = 11 : i64} {
  func.func @mlp_bn_lrelu_kernel(%arg0: i32, %arg1: i32, %arg2: memref<8x128xf32, #tpu.memory_space<vmem>>, %arg3: memref<128x128xf32, #tpu.memory_space<vmem>>, %arg4: memref<1x128xf32, #tpu.memory_space<vmem>>, %arg5: memref<8x128xf32, #tpu.memory_space<vmem>>) attributes {dimension_semantics = [#tpu.dimension_semantics<parallel>, #tpu.dimension_semantics<parallel>], iteration_bounds = array<i64: 1, 1>, scalar_prefetch = 0 : i64, scratch_operands = 0 : i64, tpu.core_type = #tpu.core_type<tc>, window_params = [{transform_indices = @transform_0, window_bounds = array<i64: 8, 128>}, {transform_indices = @transform_1, window_bounds = array<i64: 128, 128>}, {transform_indices = @transform_2, window_bounds = array<i64: 1, 128>}, {transform_indices = @transform_3, window_bounds = array<i64: 8, 128>}]} {
    %c0 = arith.constant 0 : index
    %c0_0 = arith.constant 0 : index
    %0 = vector.load %arg2[%c0, %c0_0] : memref<8x128xf32, #tpu.memory_space<vmem>>, vector<8x128xf32>
    %c0_1 = arith.constant 0 : index
    %c0_2 = arith.constant 0 : index
    %1 = vector.load %arg3[%c0_1, %c0_2] : memref<128x128xf32, #tpu.memory_space<vmem>>, vector<128x128xf32>
    %cst = arith.constant dense<0.000000e+00> : vector<8x128xf32>
    %2 = tpu.matmul %0, %1, %cst {dimension_numbers = #tpu.dot_dimension_numbers<[1], [0], [0], [1], [0, 0, 1, 1], [], []>} : vector<8x128xf32>, vector<128x128xf32>, vector<8x128xf32> -> vector<8x128xf32>
    %c0_3 = arith.constant 0 : index
    %c0_4 = arith.constant 0 : index
    %3 = vector.load %arg4[%c0_3, %c0_4] : memref<1x128xf32, #tpu.memory_space<vmem>>, vector<1x128xf32>
    %4 = vector.broadcast %3 : vector<1x128xf32> to vector<8x128xf32>
    %5 = arith.addf %2, %4 : vector<8x128xf32>
    %cst_5 = arith.constant 0.000000e+00 : f32
    %6 = vector.broadcast %cst_5 : f32 to vector<8x128xf32>
    %7 = arith.cmpf oge, %5, %6 : vector<8x128xf32>
    %cst_6 = arith.constant 1.000000e-01 : f32
    %8 = vector.broadcast %cst_6 : f32 to vector<8x128xf32>
    %9 = arith.mulf %5, %8 : vector<8x128xf32>
    %10 = arith.select %7, %5, %9 : vector<8x128xi1>, vector<8x128xf32>
    %c0_7 = arith.constant 0 : index
    %c0_8 = arith.constant 0 : index
    %11 = vector.load %arg5[%c0_7, %c0_8] : memref<8x128xf32, #tpu.memory_space<vmem>>, vector<8x128xf32>
    tpu.vector_store %arg5[%c0_7, %c0_8], %10 {strides = array<i32>} : memref<8x128xf32, #tpu.memory_space<vmem>>, vector<8x128xf32>,
    return
  }
  func.func @transform_0(%arg0: i32, %arg1: i32) -> (i32, i32) {
    %c0_i32 = arith.constant 0 : i32
    %c0_i32_0 = arith.constant 0 : i32
    return %arg0, %c0_i32 : i32, i32
  }
  func.func @transform_1(%arg0: i32, %arg1: i32) -> (i32, i32) {
    %c0_i32 = arith.constant 0 : i32
    %c0_i32_0 = arith.constant 0 : i32
    return %c0_i32, %arg1 : i32, i32
  }
  func.func @transform_2(%arg0: i32, %arg1: i32) -> (i32, i32) {
    %c0_i32 = arith.constant 0 : i32
    %c0_i32_0 = arith.constant 0 : i32
    return %c0_i32, %arg1 : i32, i32
  }
  func.func @transform_3(%arg0: i32, %arg1: i32) -> (i32, i32) {
    %c0_i32 = arith.constant 0 : i32
    return %arg0, %arg1 : i32, i32
  }
}

</mosaic_0001>

<llo_original>
// kernel: mlp_block_forward.1
$region0: #{mlp_block_forward.1}
  #allocation0 [shape = 'u32[]', space=smem, size = 0x4, offset = 0x4, fixed_abs, tag = 'smem constant byte address 0x4 - core index']
  #allocation1 [shape = 'u32[144,128]{1,0:T(1,128)}', space=vmem, size = 0x12000, scoped, tag = 'internal scratch']
  %s0 = inlined_call_operand.vmem [shape: f32[8,128], index: 0, kind: input, shape index: {}]
  %s1 = inlined_call_operand.vmem [shape: f32[128,128], index: 1, kind: input, shape index: {}]
  %s2 = inlined_call_operand.vmem [shape: f32[1,128], index: 2, kind: input, shape index: {}]
  %s3 = inlined_call_operand.vmem [shape: f32[8,128], index: 3, kind: output, shape index: {}]
  %s4 = sld [smem:[#allocation0]]
  $region22: #{mlp_block_forward.1} parent=0
    _
  %s6 = ssub.s32 1, %s4
  %s7 = scalar_select 0, %s6, %s4
  // Predicated region
  $region2: #{mlp_block_forward.1} parent=0 // pred_check
    _
  $region3: #{mlp_block_forward.1} parent=0 // pred_check_branch
    %9 = sbr.rel (0) target = $region5
  $region4: #{mlp_block_forward.1} parent=0 // pred_region
    _
  $region5: #{mlp_block_forward.1} parent=0 // pred_fallthru
    _
  // Predicated region
  $region6: #{mlp_block_forward.1} parent=0 // pred_check
    _
  $region7: #{mlp_block_forward.1} parent=0 // pred_check_branch
    %11 = sbr.rel (0) target = $region9
  $region8: #{mlp_block_forward.1} parent=0 // pred_region
    _
  $region9: #{mlp_block_forward.1} parent=0 // pred_fallthru
    _
  // Predicated region
  $region10: #{mlp_block_forward.1} parent=0 // pred_check
    _
  $region11: #{mlp_block_forward.1} parent=0 // pred_check_branch
    %13 = sbr.rel (0) target = $region13
  $region12: #{mlp_block_forward.1} parent=0 // pred_region
    _
  $region13: #{mlp_block_forward.1} parent=0 // pred_fallthru
    _
  %v14 = vld [vmem:[%s0] sm:$0xff]
  %v15 = vld [vmem:[%s1] sm:$0xff]
  %v16 = vld [vmem:[%s1 + $0x8] sm:$0xff]
  %v17 = vld [vmem:[%s1 + $0x10] sm:$0xff]
  %v18 = vld [vmem:[%s1 + $0x18] sm:$0xff]
  %v19 = vld [vmem:[%s1 + $0x20] sm:$0xff]
  %v20 = vld [vmem:[%s1 + $0x28] sm:$0xff]
  %v21 = vld [vmem:[%s1 + $0x30] sm:$0xff]
  %v22 = vld [vmem:[%s1 + $0x38] sm:$0xff]
  %v23 = vld [vmem:[%s1 + $0x40] sm:$0xff]
  %v24 = vld [vmem:[%s1 + $0x48] sm:$0xff]
  %v25 = vld [vmem:[%s1 + $0x50] sm:$0xff]
  %v26 = vld [vmem:[%s1 + $0x58] sm:$0xff]
  %v27 = vld [vmem:[%s1 + $0x60] sm:$0xff]
  %v28 = vld [vmem:[%s1 + $0x68] sm:$0xff]
  %v29 = vld [vmem:[%s1 + $0x70] sm:$0xff]
  %v30 = vld [vmem:[%s1 + $0x78] sm:$0xff]
  %v31 = vld [vmem:[%s2] sm:$0x1]
  %v33 = vlaneseq
  %v34 = vshrl.u32 %v33, 7
  %v35 = vsub.s32 0, %v34
  %v36 = vrot.slane %v31, %v35
  %38 = vmatprep.subr.mxu0 0.0
  %39 = vmatpush1.msra.mxu0 %v15
  %40 = vmatprep.subr.mxu0 0.0
  %41 = vmatpush1.msra.mxu0 %v16
  %42 = vmatprep.subr.mxu0 0.0
  %43 = vmatpush1.msra.mxu0 %v17
  %44 = vmatprep.subr.mxu0 0.0
  %45 = vmatpush1.msra.mxu0 %v18
  %46 = vmatprep.subr.mxu0 0.0
  %47 = vmatpush1.msra.mxu0 %v19
  %48 = vmatprep.subr.mxu0 0.0
  %49 = vmatpush1.msra.mxu0 %v20
  %50 = vmatprep.subr.mxu0 0.0
  %51 = vmatpush1.msra.mxu0 %v21
  %52 = vmatprep.subr.mxu0 0.0
  %53 = vmatpush1.msra.mxu0 %v22
  %54 = vmatprep.subr.mxu0 0.0
  %55 = vmatpush1.msra.mxu0 %v23
  %56 = vmatprep.subr.mxu0 0.0
  %57 = vmatpush1.msra.mxu0 %v24
  %58 = vmatprep.subr.mxu0 0.0
  %59 = vmatpush1.msra.mxu0 %v25
  %60 = vmatprep.subr.mxu0 0.0
  %61 = vmatpush1.msra.mxu0 %v26
  %62 = vmatprep.subr.mxu0 0.0
  %63 = vmatpush1.msra.mxu0 %v27
  %64 = vmatprep.subr.mxu0 0.0
  %65 = vmatpush1.msra.mxu0 %v28
  %66 = vmatprep.subr.mxu0 0.0
  %67 = vmatpush1.msra.mxu0 %v29
  %68 = vmatprep.subr.mxu0 0.0
  %69 = vmatpush1.msra.mxu0 %v30
  %70 = vmatprep.subr.mxu0 0.0
  %71 = vmatpush1.msra.mxu0 0.0
  %72 = vmatprep.subr.mxu0 0.0
  %73 = vmatpush1.msra.mxu0 0.0
  %74 = vmatprep.subr.mxu0 0.0
  %75 = vmatpush1.msra.mxu0 0.0
  %76 = vmatprep.subr.mxu0 0.0
  %77 = vmatpush1.msra.mxu0 0.0
  %78 = vmatprep.subr.mxu0 0.0
  %79 = vmatpush1.msra.mxu0 0.0
  %80 = vmatprep.subr.mxu0 0.0
  %81 = vmatpush1.msra.mxu0 0.0
  %82 = vmatprep.subr.mxu0 0.0
  %83 = vmatpush1.msra.mxu0 0.0
  %84 = vmatprep.subr.mxu0 0.0
  %85 = vmatpush1.msra.mxu0 0.0
  %86 = vmatprep.subr.mxu0 0.0
  %87 = vmatpush1.msra.mxu0 0.0
  %88 = vmatprep.subr.mxu0 0.0
  %89 = vmatpush1.msra.mxu0 0.0
  %90 = vmatprep.subr.mxu0 0.0
  %91 = vmatpush1.msra.mxu0 0.0
  %92 = vmatprep.subr.mxu0 0.0
  %93 = vmatpush1.msra.mxu0 0.0
  %94 = vmatprep.subr.mxu0 0.0
  %95 = vmatpush1.msra.mxu0 0.0
  %96 = vmatprep.subr.mxu0 0.0
  %97 = vmatpush1.msra.mxu0 0.0
  %98 = vmatprep.subr.mxu0 0.0
  %99 = vmatpush1.msra.mxu0 0.0
  %100 = vmatprep.subr.mxu0 0.0
  %101 = vmatpush1.msra.mxu0 0.0
  %102 = vmatprep.mubr.f32.mxu0 0.0
  %103 = vmatmul.mubr.f32.gmra.mrb[0].mxu0 %v14
  %v104 = vpop.f32.mrb[0].mxu0
  %v105 = vadd.f32 %v36, %v104
  %v106 = vpop.f32.mrb[0].mxu0
  %107 = vdwg.mxu0
  %vm108 = vcmp.ge.f32.partialorder %v105, 0.0
  %v109 = vmul.f32 %v105, 0.1
  %v110 = vsel %vm108, %v105, %v109
  %111 = vst [vmem:[%s3] sm:$0xff] %v110
  // Predicated region
  $region14: #{mlp_block_forward.1} parent=0 // pred_check
    _
  $region15: #{mlp_block_forward.1} parent=0 // pred_check_branch
    %113 = sbr.rel (0) target = $region17
  $region16: #{mlp_block_forward.1} parent=0 // pred_region
    _
  $region17: #{mlp_block_forward.1} parent=0 // pred_fallthru
    _
  // Predicated region
  $region18: #{mlp_block_forward.1} parent=0 // pred_check
    _
  $region19: #{mlp_block_forward.1} parent=0 // pred_check_branch
    %115 = sbr.rel (0) target = $region21
  $region20: #{mlp_block_forward.1} parent=0 // pred_region
    _
  $region21: #{mlp_block_forward.1} parent=0 // pred_fallthru
    _

</llo_original>
